<compile_context>
chip_gen: v6e
topology: v6e:2x2x1
jax: 0.10.0
libtpu: 0.0.40
codegen_flags: <defaults>
</compile_context>

<pallas_src>
import numpy as np
import jax
import jax.numpy as jnp
from jax.experimental import pallas as pl
from jax.experimental.pallas import tpu as pltpu


# ----------------------------------------------------------------------------
# Pallas kernel
# ----------------------------------------------------------------------------
def _spectral_shift_mat_kernel(u_ref, s_ref, d_ref, vh_ref, res_ref, out_ref):
    # Per-tile shapes:
    #   u:   (tm, R)    s/d: (1, R)    vh: (R, tn)    res/out: (tm, tn)
    sv = jnp.maximum(s_ref[...] + d_ref[...], 0.0)        # relu(s + delta), (1, R)
    # Apply the diagonal scale to the smaller operand (u tile: tm <= tn typically);
    # u * sv  ==  u @ diag(sv)
    scaled_u = u_ref[...] * sv                             # (tm, R) on the VPU
    out_ref[...] = (
        jnp.dot(scaled_u, vh_ref[...], preferred_element_type=jnp.float32)
        + res_ref[...]
    ).astype(out_ref.dtype)


# ----------------------------------------------------------------------------
# Tiling helpers + pallas_call wrapper
# ----------------------------------------------------------------------------
def _round_up(x, m):
    return ((x + m - 1) // m) * m


def _choose_tiles(M, N, R_pad, bytes_per_el=4, budget=6 * 1024 * 1024):
    """Pick (tm, tn): sublane-aligned tm (mult of 8), lane-dense tn (mult of 128),
    sized so one buffer set (double-buffered by Pallas) stays well inside the
    default scoped VMEM on v5e/v6e/v7x."""
    tm = min(256, _round_up(M, 8))
    tn = min(512, _round_up(N, 128))

    def tile_bytes(tm_, tn_):
        # u tile + vh tile + residual tile + out tile + s/delta rows
        return bytes_per_el * (tm_ * R_pad + R_pad * tn_ + 2 * tm_ * tn_ + 2 * R_pad)

    while tile_bytes(tm, tn) > budget and tn > 128:
        tn = max(128, _round_up(tn // 2, 128))
    while tile_bytes(tm, tn) > budget and tm > 8:
        tm = max(8, _round_up(tm // 2, 8))
    return tm, tn


def spectral_shift_matrix(u, s, delta, vh, residual):
    """out = u @ diag(relu(s + delta)) @ vh + residual, as a tiled Pallas kernel."""
    M, R = u.shape
    N = vh.shape[1]
    out_dtype = u.dtype

    # Pad the contraction dim to a multiple of 128 (MXU-aligned, and makes the
    # u lane dim / vh sublane dim layout-legal regardless of tiling).  Zero
    # padding is exact: relu(0 + 0) = 0 and zero columns of u contribute nothing.
    R_pad = _round_up(R, 128)
    tm, tn = _choose_tiles(M, N, R_pad)
    M_pad = _round_up(M, tm)          # sublane-aligned rows, divisible by tm
    N_pad = _round_up(N, tn)          # lane-dense cols (mult of 128), divisible by tn

    u_p = jnp.pad(u, ((0, M_pad - M), (0, R_pad - R)))
    vh_p = jnp.pad(vh, ((0, R_pad - R), (0, N_pad - N)))
    s_p = jnp.pad(s, (0, R_pad - R)).reshape(1, R_pad)
    d_p = jnp.pad(delta, (0, R_pad - R)).reshape(1, R_pad)
    res_p = jnp.pad(residual, ((0, M_pad - M), (0, N_pad - N)))

    grid = (M_pad // tm, N_pad // tn)

    # Full (padded) rank per tile; no K grid axis / accumulator needed at typical
    # conv-weight ranks.  TODO(synk): add a third "arbitrary" K axis with a VMEM
    # f32 accumulator if R_pad ever grows past what fits alongside (tm, tn) tiles.
    out = pl.pallas_call(
        _spectral_shift_mat_kernel,
        out_shape=jax.ShapeDtypeStruct((M_pad, N_pad), out_dtype),
        grid=grid,
        in_specs=[
            pl.BlockSpec((tm, R_pad), lambda i, j: (i, 0)),   # u
            pl.BlockSpec((1, R_pad), lambda i, j: (0, 0)),    # s
            pl.BlockSpec((1, R_pad), lambda i, j: (0, 0)),    # delta
            pl.BlockSpec((R_pad, tn), lambda i, j: (0, j)),   # vh
            pl.BlockSpec((tm, tn), lambda i, j: (i, j)),      # residual
        ],
        out_specs=pl.BlockSpec((tm, tn), lambda i, j: (i, j)),
        compiler_params=pltpu.CompilerParams(
            # Both grid axes are independent tiles -> megacore-shardable on v7x,
            # harmless on v5e/v6e.
            dimension_semantics=("parallel", "parallel"),
        ),
    )(u_p, s_p, d_p, vh_p, res_p)

    return out[:M, :N]


# ----------------------------------------------------------------------------
# Module equivalent (init / reshape glue in plain JAX / numpy)
# ----------------------------------------------------------------------------
class SpectralShift:
    def __init__(self, weight: jnp.ndarray, dim: int = 0):
        ndim = weight.ndim
        self.dim = dim if dim >= 0 else dim + ndim
        self.ndim = ndim
        if ndim > 1:
            wm = self._reshape_weight_to_matrix(weight)
            # SVD is a one-time __init__ cost (not the forward hot path): compute
            # on host with numpy, matching torch.linalg.svd(full_matrices=False).
            u, s, vh = np.linalg.svd(np.asarray(wm), full_matrices=False)
            self._u = jnp.asarray(u, dtype=weight.dtype)
            self._s = jnp.asarray(s, dtype=weight.dtype)
            self._vh = jnp.asarray(vh, dtype=weight.dtype)
            # _residual is set externally in the original module; here we use the
            # (numerically ~zero) exact-SVD reconstruction residual, kept in the
            # kernel to preserve the spec's `+ _residual.detach()` semantics.
            self._residual = wm - (self._u * self._s[None, :]) @ self._vh
            # eigenvalues_delta = randn_like(s) * 0.0 -> exactly zeros
            self.eigenvalues_delta = jnp.zeros_like(self._s)
        else:
            self.eigenvalues_delta = jnp.zeros_like(weight)
        # TODO(synk): eigenvalues_delta_cached is populated outside __init__ in the
        # original codebase; default to None (use the parameter directly).
        self.eigenvalues_delta_cached = None

    def _reshape_weight_to_matrix(self, weight):
        assert weight.ndim > 1
        if self.dim != 0:
            perm = (self.dim,) + tuple(d for d in range(weight.ndim) if d != self.dim)
            weight = jnp.transpose(weight, perm)
        return weight.reshape(weight.shape[0], -1)

    def _reshape_matrix_to_weight(self, weight_mat, shape):
        if self.dim != 0:
            new_shape = (shape[self.dim],) + tuple(
                shape[d] for d in range(len(shape)) if d != self.dim
            )
            weight = weight_mat.reshape(new_shape)
            inv_perm = np.argsort(
                [self.dim] + [d for d in range(len(shape)) if d != self.dim]
            )
            weight = jnp.transpose(weight, tuple(int(p) for p in inv_perm))
        else:
            weight = weight_mat.reshape(shape)
        return weight

    def forward(self, weight: jnp.ndarray) -> jnp.ndarray:
        delta = (
            self.eigenvalues_delta
            if self.eigenvalues_delta_cached is None
            else self.eigenvalues_delta_cached
        )
        if weight.ndim == 1:
            # Single elementwise add: plain JAX per perf guidance — a (1, N)
            # Pallas block can't amortize per-step overhead and wastes sublanes.
            return jax.lax.stop_gradient(weight) + delta
        else:
            weight_mat = spectral_shift_matrix(
                self._u, self._s, delta, self._vh,
                jax.lax.stop_gradient(self._residual),
            )
            return self._reshape_matrix_to_weight(weight_mat, weight.shape)


# ----------------------------------------------------------------------------
# Demo / correctness check
# ----------------------------------------------------------------------------
if __name__ == "__main__":
    key = jax.random.PRNGKey(0)
    # small conv-like weight, OIHW: (C_out, C_in, kH, kW) = (32, 4, 4, 4)
    # -> spectral matrix (M, N) = (32, 64), rank R = 32
    weight = jax.random.normal(key, (32, 4, 4, 4), dtype=jnp.float32)

    mod = SpectralShift(weight, dim=0)
    # give the delta a deterministic non-zero value so the kernel does real work
    mod.eigenvalues_delta = 0.1 * jax.random.normal(
        jax.random.PRNGKey(1), mod._s.shape, dtype=jnp.float32
    )

    out = mod.forward(weight)
    out = jax.block_until_ready(out)

    # pure-JAX reference of the forward math
    sv_ref = jnp.maximum(mod._s + mod.eigenvalues_delta, 0.0)
    wm_ref = (mod._u * sv_ref[None, :]) @ mod._vh + mod._residual
    ref = wm_ref.reshape(weight.shape)

    assert out.shape == weight.shape and out.dtype == weight.dtype
    np.testing.assert_allclose(np.asarray(out), np.asarray(ref), atol=1e-4, rtol=1e-4)

    # also exercise the 1-D branch
    bias = jax.random.normal(jax.random.PRNGKey(2), (32,), dtype=jnp.float32)
    mod1d = SpectralShift(bias)
    out1d = jax.block_until_ready(mod1d.forward(bias))
    np.testing.assert_allclose(np.asarray(out1d), np.asarray(bias), atol=1e-6)

    print("KERNEL_OK")
</pallas_src>

<mosaic_0001>
module attributes {stable_mosaic.version = 11 : i64} {
  func.func @_spectral_shift_mat_kernel(%arg0: i32, %arg1: i32, %arg2: memref<32x128xf32, #tpu.memory_space<vmem>>, %arg3: memref<1x128xf32, #tpu.memory_space<vmem>>, %arg4: memref<1x128xf32, #tpu.memory_space<vmem>>, %arg5: memref<128x128xf32, #tpu.memory_space<vmem>>, %arg6: memref<32x128xf32, #tpu.memory_space<vmem>>, %arg7: memref<32x128xf32, #tpu.memory_space<vmem>>) attributes {dimension_semantics = [#tpu.dimension_semantics<parallel>, #tpu.dimension_semantics<parallel>], iteration_bounds = array<i64: 1, 1>, scalar_prefetch = 0 : i64, scratch_operands = 0 : i64, tpu.core_type = #tpu.core_type<tc>, window_params = [{transform_indices = @transform_0, window_bounds = array<i64: 32, 128>}, {pipeline_mode = #tpu.pipeline_mode<synchronous>, transform_indices = @transform_1, window_bounds = array<i64: 1, 128>}, {pipeline_mode = #tpu.pipeline_mode<synchronous>, transform_indices = @transform_2, window_bounds = array<i64: 1, 128>}, {transform_indices = @transform_3, window_bounds = array<i64: 128, 128>}, {transform_indices = @transform_4, window_bounds = array<i64: 32, 128>}, {transform_indices = @transform_5, window_bounds = array<i64: 32, 128>}]} {
    %c0 = arith.constant 0 : index
    %c0_0 = arith.constant 0 : index
    %0 = vector.load %arg3[%c0, %c0_0] : memref<1x128xf32, #tpu.memory_space<vmem>>, vector<1x128xf32>
    %c0_1 = arith.constant 0 : index
    %c0_2 = arith.constant 0 : index
    %1 = vector.load %arg4[%c0_1, %c0_2] : memref<1x128xf32, #tpu.memory_space<vmem>>, vector<1x128xf32>
    %2 = arith.addf %0, %1 : vector<1x128xf32>
    %cst = arith.constant 0.000000e+00 : f32
    %3 = vector.broadcast %cst : f32 to vector<1x128xf32>
    %4 = arith.maximumf %2, %3 : vector<1x128xf32>
    %c0_3 = arith.constant 0 : index
    %c0_4 = arith.constant 0 : index
    %5 = vector.load %arg2[%c0_3, %c0_4] : memref<32x128xf32, #tpu.memory_space<vmem>>, vector<32x128xf32>
    %6 = vector.broadcast %4 : vector<1x128xf32> to vector<32x128xf32>
    %7 = arith.mulf %5, %6 : vector<32x128xf32>
    %c0_5 = arith.constant 0 : index
    %c0_6 = arith.constant 0 : index
    %8 = vector.load %arg5[%c0_5, %c0_6] : memref<128x128xf32, #tpu.memory_space<vmem>>, vector<128x128xf32>
    %cst_7 = arith.constant dense<0.000000e+00> : vector<32x128xf32>
    %9 = tpu.matmul %7, %8, %cst_7 {dimension_numbers = #tpu.dot_dimension_numbers<[1], [0], [0], [1], [0, 0, 1, 1], [], []>} : vector<32x128xf32>, vector<128x128xf32>, vector<32x128xf32> -> vector<32x128xf32>
    %c0_8 = arith.constant 0 : index
    %c0_9 = arith.constant 0 : index
    %10 = vector.load %arg6[%c0_8, %c0_9] : memref<32x128xf32, #tpu.memory_space<vmem>>, vector<32x128xf32>
    %11 = arith.addf %9, %10 : vector<32x128xf32>
    %c0_10 = arith.constant 0 : index
    %c0_11 = arith.constant 0 : index
    %12 = vector.load %arg7[%c0_10, %c0_11] : memref<32x128xf32, #tpu.memory_space<vmem>>, vector<32x128xf32>
    tpu.vector_store %arg7[%c0_10, %c0_11], %11 {strides = array<i32>} : memref<32x128xf32, #tpu.memory_space<vmem>>, vector<32x128xf32>,
    return
  }
  func.func @transform_0(%arg0: i32, %arg1: i32) -> (i32, i32) {
    %c0_i32 = arith.constant 0 : i32
    %c0_i32_0 = arith.constant 0 : i32
    return %arg0, %c0_i32 : i32, i32
  }
  func.func @transform_1(%arg0: i32, %arg1: i32) -> (i32, i32) {
    %c0_i32 = arith.constant 0 : i32
    %c0_i32_0 = arith.constant 0 : i32
    %c0_i32_1 = arith.constant 0 : i32
    return %c0_i32, %c0_i32_0 : i32, i32
  }
  func.func @transform_2(%arg0: i32, %arg1: i32) -> (i32, i32) {
    %c0_i32 = arith.constant 0 : i32
    %c0_i32_0 = arith.constant 0 : i32
    %c0_i32_1 = arith.constant 0 : i32
    return %c0_i32, %c0_i32_0 : i32, i32
  }
  func.func @transform_3(%arg0: i32, %arg1: i32) -> (i32, i32) {
    %c0_i32 = arith.constant 0 : i32
    %c0_i32_0 = arith.constant 0 : i32
    return %c0_i32, %arg1 : i32, i32
  }
  func.func @transform_4(%arg0: i32, %arg1: i32) -> (i32, i32) {
    %c0_i32 = arith.constant 0 : i32
    return %arg0, %arg1 : i32, i32
  }
  func.func @transform_5(%arg0: i32, %arg1: i32) -> (i32, i32) {
    %c0_i32 = arith.constant 0 : i32
    return %arg0, %arg1 : i32, i32
  }
}

</mosaic_0001>

<llo_original>
// kernel: tpu_custom_call.1
$region0: #{tpu_custom_call.1}
  #allocation0 [shape = 'u32[]', space=smem, size = 0x4, offset = 0x4, fixed_abs, tag = 'smem constant byte address 0x4 - core index']
  #allocation1 [shape = 'u32[144,128]{1,0:T(1,128)}', space=vmem, size = 0x12000, scoped, tag = 'internal scratch']
  %s0 = inlined_call_operand.hbm [shape: f32[32,128], index: 0, kind: input, shape index: {}]
  %s1 = inlined_call_operand.vmem [shape: f32[1,128], index: 1, kind: input, shape index: {}]
  %s2 = inlined_call_operand.vmem [shape: f32[1,128], index: 2, kind: input, shape index: {}]
  %s3 = inlined_call_operand.hbm [shape: f32[128,128], index: 3, kind: input, shape index: {}]
  %s4 = inlined_call_operand.hbm [shape: f32[32,128], index: 4, kind: input, shape index: {}]
  %s5 = inlined_call_operand.hbm [shape: f32[32,128], index: 5, kind: output, shape index: {}]
  %s6 = sld [smem:[#allocation0]]
  $region42: #{tpu_custom_call.1} parent=0
    _
  %s8 = ssub.s32 1, %s6
  %s9 = scalar_select 0, %s8, %s6
  $region1: #{tpu_custom_call.1} parent=0
    #allocation2 [shape = 'u8[16384]{0}', space=vmem, size = 0x4000, scoped, tag = 'input window, operand 0, single buffered']
    #allocation3 [shape = 's32[1]{0}', space=sflag, size = 0x4, scoped, tag = 'scoped memory for tpu_custom_call.1']
    #allocation4 [shape = 's32[1]{0}', space=sflag, size = 0x4, scoped, tag = 'scoped memory for tpu_custom_call.1']
    #allocation5 [shape = 'u8[65536]{0}', space=vmem, size = 0x10000, scoped, tag = 'input window, operand 3, single buffered']
    #allocation6 [shape = 's32[1]{0}', space=sflag, size = 0x4, scoped, tag = 'scoped memory for tpu_custom_call.1']
    #allocation7 [shape = 'u8[16384]{0}', space=vmem, size = 0x4000, scoped, tag = 'input window, operand 4, single buffered']
    #allocation8 [shape = 'u8[16384]{0}', space=vmem, size = 0x4000, scoped, tag = 'output window, operand 0, single buffered']
    %10 = vsyncpa [#allocation3], 0
    %11 = vsyncpa [#allocation6], 0
    %12 = vsyncpa [#allocation4], 0
    // Predicated region
    $region2: #{tpu_custom_call.1} parent=1 // pred_check
      _
    $region3: #{tpu_custom_call.1} parent=1 // pred_check_branch
      %14 = sbr.rel (0) target = $region5
    $region4: #{tpu_custom_call.1} parent=1 // pred_region
      %s16 = ssub.s32 512, 512
      %17 = vsyncadd [#allocation3], %s16
      %s18 = sshll.u32 [#allocation2], 4
      %s19 = int_to_ptr.vmem [resolvable:$true] %s18
      %24 = dma.hbm_to_vmem [thread:$0]  %s0, 512, %s19, [#allocation3], 128, 128, 8
    $region5: #{tpu_custom_call.1} parent=1 // pred_fallthru
      _
    // Predicated region
    $region6: #{tpu_custom_call.1} parent=1 // pred_check
      _
    $region7: #{tpu_custom_call.1} parent=1 // pred_check_branch
      %26 = sbr.rel (0) target = $region9
    $region8: #{tpu_custom_call.1} parent=1 // pred_region
      _
    $region9: #{tpu_custom_call.1} parent=1 // pred_fallthru
      _
    // Predicated region
    $region10: #{tpu_custom_call.1} parent=1 // pred_check
      _
    $region11: #{tpu_custom_call.1} parent=1 // pred_check_branch
      %28 = sbr.rel (0) target = $region13
    $region12: #{tpu_custom_call.1} parent=1 // pred_region
      _
    $region13: #{tpu_custom_call.1} parent=1 // pred_fallthru
      _
    // Predicated region
    $region14: #{tpu_custom_call.1} parent=1 // pred_check
      _
    $region15: #{tpu_custom_call.1} parent=1 // pred_check_branch
      %30 = sbr.rel (0) target = $region17
    $region16: #{tpu_custom_call.1} parent=1 // pred_region
      %s32 = ssub.s32 2048, 2048
      %33 = vsyncadd [#allocation6], %s32
      %s34 = sshll.u32 [#allocation5], 4
      %s35 = int_to_ptr.vmem [resolvable:$true] %s34
      %40 = dma.hbm_to_vmem [thread:$0]  %s3, 2048, %s35, [#allocation6], 128, 128, 8
    $region17: #{tpu_custom_call.1} parent=1 // pred_fallthru
      _
    // Predicated region
    $region18: #{tpu_custom_call.1} parent=1 // pred_check
      _
    $region19: #{tpu_custom_call.1} parent=1 // pred_check_branch
      %42 = sbr.rel (0) target = $region21
    $region20: #{tpu_custom_call.1} parent=1 // pred_region
      %s44 = ssub.s32 512, 512
      %45 = vsyncadd [#allocation6], %s44
      %s46 = sshll.u32 [#allocation7], 4
      %s47 = int_to_ptr.vmem [resolvable:$true] %s46
      %52 = dma.hbm_to_vmem [thread:$0]  %s4, 512, %s47, [#allocation6], 128, 128, 8
    $region21: #{tpu_custom_call.1} parent=1 // pred_fallthru
      _
    // Predicated region
    $region22: #{tpu_custom_call.1} parent=1 // pred_check
      _
    $region23: #{tpu_custom_call.1} parent=1 // pred_check_branch
      %54 = sbr.rel (0) target = $region25
    $region24: #{tpu_custom_call.1} parent=1 // pred_region
      %55 = dma.done [#allocation3], 512
    $region25: #{tpu_custom_call.1} parent=1 // pred_fallthru
      _
    // Predicated region
    $region26: #{tpu_custom_call.1} parent=1 // pred_check
      _
    $region27: #{tpu_custom_call.1} parent=1 // pred_check_branch
      %57 = sbr.rel (0) target = $region29
    $region28: #{tpu_custom_call.1} parent=1 // pred_region
      %58 = dma.done [#allocation6], 2048
    $region29: #{tpu_custom_call.1} parent=1 // pred_fallthru
      _
    // Predicated region
    $region30: #{tpu_custom_call.1} parent=1 // pred_check
      _
    $region31: #{tpu_custom_call.1} parent=1 // pred_check_branch
      %60 = sbr.rel (0) target = $region33
    $region32: #{tpu_custom_call.1} parent=1 // pred_region
      %61 = dma.done [#allocation6], 512
    $region33: #{tpu_custom_call.1} parent=1 // pred_fallthru
      _
    %v62 = vld [vmem:[%s1] sm:$0x1]
    %v63 = vld [vmem:[%s2] sm:$0x1]
    %v64 = vadd.f32 %v62, %v63
    %v65 = vmax.f32 %v64, 0.0
    %v66 = vld [vmem:[#allocation2] sm:$0xff]
    %v67 = vld [vmem:[#allocation2 + $0x8] sm:$0xff]
    %v68 = vld [vmem:[#allocation2 + $0x10] sm:$0xff]
    %v69 = vld [vmem:[#allocation2 + $0x18] sm:$0xff]
    %v71 = vlaneseq
    %v72 = vshrl.u32 %v71, 7
    %v73 = vsub.s32 0, %v72
    %v74 = vrot.slane %v65, %v73
    %v76 = vmul.f32 %v66, %v74
    %v77 = vmul.f32 %v67, %v74
    %v78 = vmul.f32 %v68, %v74
    %v79 = vmul.f32 %v69, %v74
    %v80 = vld [vmem:[#allocation5] sm:$0xff]
    %v81 = vld [vmem:[#allocation5 + $0x8] sm:$0xff]
    %v82 = vld [vmem:[#allocation5 + $0x10] sm:$0xff]
    %v83 = vld [vmem:[#allocation5 + $0x18] sm:$0xff]
    %v84 = vld [vmem:[#allocation5 + $0x20] sm:$0xff]
    %v85 = vld [vmem:[#allocation5 + $0x28] sm:$0xff]
    %v86 = vld [vmem:[#allocation5 + $0x30] sm:$0xff]
    %v87 = vld [vmem:[#allocation5 + $0x38] sm:$0xff]
    %v88 = vld [vmem:[#allocation5 + $0x40] sm:$0xff]
    %v89 = vld [vmem:[#allocation5 + $0x48] sm:$0xff]
    %v90 = vld [vmem:[#allocation5 + $0x50] sm:$0xff]
    %v91 = vld [vmem:[#allocation5 + $0x58] sm:$0xff]
    %v92 = vld [vmem:[#allocation5 + $0x60] sm:$0xff]
    %v93 = vld [vmem:[#allocation5 + $0x68] sm:$0xff]
    %v94 = vld [vmem:[#allocation5 + $0x70] sm:$0xff]
    %v95 = vld [vmem:[#allocation5 + $0x78] sm:$0xff]
    %v96 = vld [vmem:[#allocation7] sm:$0xff]
    %v97 = vld [vmem:[#allocation7 + $0x8] sm:$0xff]
    %v98 = vld [vmem:[#allocation7 + $0x10] sm:$0xff]
    %v99 = vld [vmem:[#allocation7 + $0x18] sm:$0xff]
    %100 = vmatprep.subr.mxu0 0.0
    %101 = vmatpush1.msra.mxu0 %v95
    %102 = vmatprep.subr.mxu0 0.0
    %103 = vmatpush1.msra.mxu0 %v94
    %104 = vmatprep.subr.mxu0 0.0
    %105 = vmatpush1.msra.mxu0 %v93
    %106 = vmatprep.subr.mxu0 0.0
    %107 = vmatpush1.msra.mxu0 %v92
    %108 = vmatprep.subr.mxu0 0.0
    %109 = vmatpush1.msra.mxu0 %v91
    %110 = vmatprep.subr.mxu0 0.0
    %111 = vmatpush1.msra.mxu0 %v90
    %112 = vmatprep.subr.mxu0 0.0
    %113 = vmatpush1.msra.mxu0 %v89
    %114 = vmatprep.subr.mxu0 0.0
    %115 = vmatpush1.msra.mxu0 %v88
    %116 = vmatprep.subr.mxu0 0.0
    %117 = vmatpush1.msra.mxu0 %v87
    %118 = vmatprep.subr.mxu0 0.0
    %119 = vmatpush1.msra.mxu0 %v86
    %120 = vmatprep.subr.mxu0 0.0
    %121 = vmatpush1.msra.mxu0 %v85
    %122 = vmatprep.subr.mxu0 0.0
    %123 = vmatpush1.msra.mxu0 %v84
    %124 = vmatprep.subr.mxu0 0.0
    %125 = vmatpush1.msra.mxu0 %v83
    %126 = vmatprep.subr.mxu0 0.0
    %127 = vmatpush1.msra.mxu0 %v82
    %128 = vmatprep.subr.mxu0 0.0
    %129 = vmatpush1.msra.mxu0 %v81
    %130 = vmatprep.subr.mxu0 0.0
    %131 = vmatpush1.msra.mxu0 %v80
    %132 = vmatprep.subr.mxu0 0.0
    %133 = vmatpush2.msra.mxu0 0.0
    %134 = vmatprep.subr.mxu0 0.0
    %135 = vmatpush2.msra.mxu0 0.0
    %136 = vmatprep.subr.mxu0 0.0
    %137 = vmatpush2.msra.mxu0 0.0
    %138 = vmatprep.subr.mxu0 0.0
    %139 = vmatpush2.msra.mxu0 0.0
    %140 = vmatprep.subr.mxu0 0.0
    %141 = vmatpush2.msra.mxu0 0.0
    %142 = vmatprep.subr.mxu0 0.0
    %143 = vmatpush2.msra.mxu0 0.0
    %144 = vmatprep.subr.mxu0 0.0
    %145 = vmatpush2.msra.mxu0 0.0
    %146 = vmatprep.subr.mxu0 0.0
    %147 = vmatpush2.msra.mxu0 0.0
    %148 = vmatprep.subr.mxu0 0.0
    %149 = vmatpush2.msra.mxu0 0.0
    %150 = vmatprep.subr.mxu0 0.0
    %151 = vmatpush2.msra.mxu0 0.0
    %152 = vmatprep.subr.mxu0 0.0
    %153 = vmatpush2.msra.mxu0 0.0
    %154 = vmatprep.subr.mxu0 0.0
    %155 = vmatpush2.msra.mxu0 0.0
    %156 = vmatprep.subr.mxu0 0.0
    %157 = vmatpush2.msra.mxu0 0.0
    %158 = vmatprep.subr.mxu0 0.0
    %159 = vmatpush2.msra.mxu0 0.0
    %160 = vmatprep.subr.mxu0 0.0
    %161 = vmatpush2.msra.mxu0 0.0
    %162 = vmatprep.subr.mxu0 0.0
    %163 = vmatpush2.msra.mxu0 0.0
    %164 = vmatprep.mubr.f32.mxu0 0.0
    %165 = vmatmul.mubr.f32.gmra.mxu0 %v76
    %v166 = vpop.f32.mrf.mxu0
    %v167 = vadd.f32 %v96, %v166
    %v168 = vpop.f32.mrf.mxu0
    %169 = vmatprep.mubr.f32.mxu0 0.0
    %170 = vmatmul.mubr.f32.gmra.mxu0 %v77
    %v171 = vpop.f32.mrf.mxu0
    %v172 = vadd.f32 %v97, %v171
    %v173 = vpop.f32.mrf.mxu0
    %174 = vmatprep.mubr.f32.mxu0 0.0
    %175 = vmatmul.mubr.f32.gmra.mxu0 %v78
    %v176 = vpop.f32.mrf.mxu0
    %v177 = vadd.f32 %v98, %v176
    %v178 = vpop.f32.mrf.mxu0
    %179 = vmatprep.mubr.f32.mxu0 0.0
    %180 = vmatmul.mubr.f32.gmra.mxu0 %v79
    %v181 = vpop.f32.mrf.mxu0
    %v182 = vadd.f32 %v99, %v181
    %v183 = vpop.f32.mrf.mxu0
    %184 = vdwg.mxu0
    %185 = vst [vmem:[#allocation8] sm:$0xff] %v167
    %186 = vst [vmem:[#allocation8 + $0x8] sm:$0xff] %v172
    %187 = vst [vmem:[#allocation8 + $0x10] sm:$0xff] %v177
    %188 = vst [vmem:[#allocation8 + $0x18] sm:$0xff] %v182
    // Predicated region
    $region34: #{tpu_custom_call.1} parent=1 // pred_check
      _
    $region35: #{tpu_custom_call.1} parent=1 // pred_check_branch
      %190 = sbr.rel (0) target = $region37
    $region36: #{tpu_custom_call.1} parent=1 // pred_region
      %s192 = ssub.s32 512, 512
      %193 = vsyncadd [#allocation4], %s192
      %s194 = sshll.u32 [#allocation8], 4
      %s195 = int_to_ptr.vmem [resolvable:$true] %s194
      %200 = dma.vmem_to_hbm [thread:$0]  %s195, 512, %s5, [#allocation4], 128, 128, 8
    $region37: #{tpu_custom_call.1} parent=1 // pred_fallthru
      _
    // Predicated region
    $region38: #{tpu_custom_call.1} parent=1 // pred_check
      _
    $region39: #{tpu_custom_call.1} parent=1 // pred_check_branch
      %202 = sbr.rel (0) target = $region41
    $region40: #{tpu_custom_call.1} parent=1 // pred_region
      %203 = dma.done [#allocation4], 512
    $region41: #{tpu_custom_call.1} parent=1 // pred_fallthru
      _
    %204 = vsyncpa [#allocation3], 1
    %205 = vsyncpa [#allocation6], 1
    %206 = vsyncpa [#allocation4], 1

</llo_original>
